<compile_context>
chip_gen: v7x
topology: tpu7x:2x2x1
jax: 0.10.0
libtpu: 0.0.40
codegen_flags: <defaults>
</compile_context>

<pallas_src>
import jax
import jax.numpy as jnp
from jax.experimental import pallas as pl
from jax.experimental.pallas import tpu as pltpu

C_IN = 3                    # RGB input channels
N_AU = 5                    # number of action-unit heatmap channels
RESIZE = 16                 # stand-in for transforms.Resize(256) at small scale
HW = RESIZE * RESIZE        # 256 spatial positions per image
N_ROWS = HW // 128          # sublane rows per image (2 at toy scale, 512 at 256^2)
ROWS_PER_CHUNK = min(N_ROWS, 256)   # HW rows per grid step (multiple of 8 at scale)
N_CHUNKS = N_ROWS // ROWS_PER_CHUNK


def au_loss_kernel(src_ref, gen_ref, w_ref, b_ref, out_ref, mxs_ref, mxg_ref):
    """Grid = (batch, hw_chunks).  One step == one HW chunk of one image pair.

    src_ref, gen_ref : (C_IN, ROWS_PER_CHUNK, 128) VMEM  (batch dim squeezed)
    w_ref            : (C_IN, N_AU)  SMEM   1x1-conv head weights (scalar reads)
    b_ref            : (N_AU, 1)     VMEM   head bias (vector add in finalize)
    out_ref          : (1, 1)        VMEM   per-image partial loss
    mxs_ref, mxg_ref : (N_AU, 128)   VMEM   running per-AU lane-max (src / gen)
    """
    chunk = pl.program_id(1)

    @pl.when(chunk == 0)
    def _init():
        mxs_ref[...] = jnp.full_like(mxs_ref, -jnp.inf)
        mxg_ref[...] = jnp.full_like(mxg_ref, -jnp.inf)

    # Hoist the 6 channel-slab loads out of the unrolled AU loop.
    s0, s1, s2 = src_ref[0], src_ref[1], src_ref[2]   # each (ROWS, 128)
    g0, g1, g2 = gen_ref[0], gen_ref[1], gen_ref[2]

    for k in range(N_AU):                             # unrolled (5 AU channels)
        # 1x1-conv head channel k on the VPU: scalar-broadcast FMAs.
        hm_s = w_ref[0, k] * s0 + w_ref[1, k] * s1 + w_ref[2, k] * s2
        hm_g = w_ref[0, k] * g0 + w_ref[1, k] * g1 + w_ref[2, k] * g2
        # Reduce the chunk's sublane rows; keep a running 128-lane max per AU.
        row_s = jnp.max(hm_s, axis=0, keepdims=True)              # (1, 128)
        row_g = jnp.max(hm_g, axis=0, keepdims=True)
        mxs_ref[pl.ds(k, 1), :] = jnp.maximum(mxs_ref[pl.ds(k, 1), :], row_s)
        mxg_ref[pl.ds(k, 1), :] = jnp.maximum(mxg_ref[pl.ds(k, 1), :], row_g)

    @pl.when(chunk == pl.num_programs(1) - 1)
    def _finalize():
        m_s = jnp.max(mxs_ref[...], axis=1, keepdims=True)        # (N_AU, 1)
        m_g = jnp.max(mxg_ref[...], axis=1, keepdims=True)
        b = b_ref[...]                                            # (N_AU, 1)
        p_s = jnp.clip(m_s + b, 0.0, 5.0)      # bias commutes with the max
        p_g = jnp.clip(m_g + b, 0.0, 5.0)
        # mean_k |p_s/5 - p_g/5|  ==  sum_k |p_s - p_g| * 1/(5*N_AU)
        out_ref[...] = jnp.sum(jnp.abs(p_s - p_g), keepdims=True) * (
            1.0 / (5.0 * N_AU))


def _prep_images(x):
    """NCHW float images -> (B, C, HW/128, 128), f32.

    The (H, W) trailing dims are contiguous, so regrouping them into
    (HW/128, 128) is a pure metadata reshape (no transpose / HBM relayout)."""
    B = x.shape[0]
    x = jax.image.resize(x.astype(jnp.float32),
                         (B, C_IN, RESIZE, RESIZE), method="bilinear")
    return x.reshape(B, C_IN, N_ROWS, 128)


def au_loss_pallas(src_imgs, gen_imgs, weight, bias):
    """src_imgs, gen_imgs: [B, 3, H, W] (NCHW).  Returns scalar loss."""
    B = src_imgs.shape[0]

    src = _prep_images(src_imgs)                      # (B, C, N_ROWS, 128)
    gen = _prep_images(gen_imgs)
    w = weight.astype(jnp.float32)                    # (C_IN, N_AU) -> SMEM
    b2d = bias.astype(jnp.float32).reshape(N_AU, 1)   # (N_AU, 1)    -> VMEM

    partial = pl.pallas_call(
        au_loss_kernel,
        out_shape=jax.ShapeDtypeStruct((B, 1, 1), jnp.float32),
        grid_spec=pltpu.PrefetchScalarGridSpec(
            num_scalar_prefetch=0,
            grid=(B, N_CHUNKS),
            in_specs=[
                pl.BlockSpec((None, C_IN, ROWS_PER_CHUNK, 128),
                             lambda b, c: (b, 0, c, 0)),
                pl.BlockSpec((None, C_IN, ROWS_PER_CHUNK, 128),
                             lambda b, c: (b, 0, c, 0)),
                pl.BlockSpec(memory_space=pltpu.MemorySpace.SMEM),   # weights
                pl.BlockSpec((N_AU, 1), lambda b, c: (0, 0)),        # bias
            ],
            # Per-image partial loss in its own block -> safe under a
            # "parallel" batch axis (no shared accumulator across cores).
            out_specs=pl.BlockSpec((None, 1, 1), lambda b, c: (b, 0, 0)),
            scratch_shapes=[
                pltpu.VMEM((N_AU, 128), jnp.float32),   # running max, src
                pltpu.VMEM((N_AU, 128), jnp.float32),   # running max, gen
            ],
        ),
        compiler_params=pltpu.CompilerParams(
            dimension_semantics=("parallel", "arbitrary")),
    )(src, gen, w, b2d)

    return jnp.sum(partial)      # sum of per-image L1 losses over the batch


def au_loss_ref(src_imgs, gen_imgs, weight, bias):
    """Pure-JAX reference for correctness checking."""
    B = src_imgs.shape[0]

    def detect(x):
        x = jax.image.resize(x.astype(jnp.float32),
                             (B, C_IN, RESIZE, RESIZE), method="bilinear")
        hm = jnp.einsum("bchw,ck->bkhw", x, weight) + bias[None, :, None, None]
        m = jnp.max(hm, axis=(2, 3))                 # (B, 5)
        return jnp.clip(m, 0.0, 5.0) / 5.0

    s = detect(src_imgs)
    g = detect(gen_imgs)
    per_img = jnp.mean(jnp.abs(s - g), axis=1)       # L1Loss per image
    return jnp.sum(per_img)                          # sum over batch


if __name__ == "__main__":
    key = jax.random.PRNGKey(0)
    k_src, k_gen, k_w, k_b = jax.random.split(key, 4)

    B, H, W = 2, 20, 20
    src_imgs = jax.random.uniform(k_src, (B, C_IN, H, W), jnp.float32)
    gen_imgs = jax.random.uniform(k_gen, (B, C_IN, H, W), jnp.float32)

    # Deterministic synthetic AU-detector head parameters (3 -> 5 channels).
    weight = 0.5 * jax.random.normal(k_w, (C_IN, N_AU), jnp.float32)
    bias = 0.1 * jax.random.normal(k_b, (N_AU,), jnp.float32)

    loss = jax.block_until_ready(au_loss_pallas(src_imgs, gen_imgs, weight, bias))
    ref = jax.block_until_ready(au_loss_ref(src_imgs, gen_imgs, weight, bias))

    assert jnp.allclose(loss, ref, rtol=1e-5, atol=1e-5), (loss, ref)
    print("KERNEL_OK")
</pallas_src>

<mosaic_0001>
module attributes {stable_mosaic.version = 11 : i64} {
  func.func @au_loss_kernel(%arg0: i32, %arg1: i32, %arg2: memref<1x3x2x128xf32, #tpu.memory_space<vmem>>, %arg3: memref<1x3x2x128xf32, #tpu.memory_space<vmem>>, %arg4: memref<3x5xf32, #tpu.memory_space<smem>>, %arg5: memref<5x1xf32, #tpu.memory_space<vmem>>, %arg6: memref<1x1x1xf32, #tpu.memory_space<vmem>>, %arg7: memref<5x128xf32, #tpu.memory_space<vmem>>, %arg8: memref<5x128xf32, #tpu.memory_space<vmem>>) attributes {dimension_semantics = [#tpu.dimension_semantics<parallel>, #tpu.dimension_semantics<arbitrary>], iteration_bounds = array<i64: 2, 1>, scalar_prefetch = 0 : i64, scratch_operands = 2 : i64, tpu.core_type = #tpu.core_type<tc>, window_params = [{transform_indices = @transform_0, window_bounds = array<i64: 1, 3, 2, 128>}, {transform_indices = @transform_1, window_bounds = array<i64: 1, 3, 2, 128>}, {transform_indices = @transform_2, window_bounds = array<i64: 3, 5>}, {pipeline_mode = #tpu.pipeline_mode<synchronous>, transform_indices = @transform_3, window_bounds = array<i64: 5, 1>}, {transform_indices = @transform_4, window_bounds = array<i64: 1, 1, 1>}]} {
    %c0_i32 = arith.constant 0 : i32
    %0 = arith.cmpi eq, %arg1, %c0_i32 : i32
    %1 = arith.extui %0 : i1 to i32
    %c0_i32_0 = arith.constant 0 : i32
    %2 = arith.cmpi ne, %1, %c0_i32_0 : i32
    scf.if %2 {
      %cst_131 = arith.constant 0xFF800000 : f32
      %178 = vector.broadcast %cst_131 : f32 to vector<5x128xf32>
      %c0_132 = arith.constant 0 : index
      %c0_133 = arith.constant 0 : index
      %179 = vector.load %arg7[%c0_132, %c0_133] : memref<5x128xf32, #tpu.memory_space<vmem>>, vector<5x128xf32>
      tpu.vector_store %arg7[%c0_132, %c0_133], %178 {strides = array<i32>} : memref<5x128xf32, #tpu.memory_space<vmem>>, vector<5x128xf32>,
      %cst_134 = arith.constant 0xFF800000 : f32
      %180 = vector.broadcast %cst_134 : f32 to vector<5x128xf32>
      %c0_135 = arith.constant 0 : index
      %c0_136 = arith.constant 0 : index
      %181 = vector.load %arg8[%c0_135, %c0_136] : memref<5x128xf32, #tpu.memory_space<vmem>>, vector<5x128xf32>
      tpu.vector_store %arg8[%c0_135, %c0_136], %180 {strides = array<i32>} : memref<5x128xf32, #tpu.memory_space<vmem>>, vector<5x128xf32>,
    } else {
    }
    %c0 = arith.constant 0 : index
    %c0_1 = arith.constant 0 : index
    %c0_2 = arith.constant 0 : index
    %c0_3 = arith.constant 0 : index
    %3 = vector.load %arg2[%c0, %c0_1, %c0_2, %c0_3] : memref<1x3x2x128xf32, #tpu.memory_space<vmem>>, vector<1x1x2x128xf32>
    %4 = vector.shape_cast %3 : vector<1x1x2x128xf32> to vector<2x128xf32>
    %c0_4 = arith.constant 0 : index
    %c1 = arith.constant 1 : index
    %c0_5 = arith.constant 0 : index
    %c0_6 = arith.constant 0 : index
    %5 = vector.load %arg2[%c0_4, %c1, %c0_5, %c0_6] : memref<1x3x2x128xf32, #tpu.memory_space<vmem>>, vector<1x1x2x128xf32>
    %6 = vector.shape_cast %5 : vector<1x1x2x128xf32> to vector<2x128xf32>
    %c0_7 = arith.constant 0 : index
    %c2 = arith.constant 2 : index
    %c0_8 = arith.constant 0 : index
    %c0_9 = arith.constant 0 : index
    %7 = vector.load %arg2[%c0_7, %c2, %c0_8, %c0_9] : memref<1x3x2x128xf32, #tpu.memory_space<vmem>>, vector<1x1x2x128xf32>
    %8 = vector.shape_cast %7 : vector<1x1x2x128xf32> to vector<2x128xf32>
    %c0_10 = arith.constant 0 : index
    %c0_11 = arith.constant 0 : index
    %c0_12 = arith.constant 0 : index
    %c0_13 = arith.constant 0 : index
    %9 = vector.load %arg3[%c0_10, %c0_11, %c0_12, %c0_13] : memref<1x3x2x128xf32, #tpu.memory_space<vmem>>, vector<1x1x2x128xf32>
    %10 = vector.shape_cast %9 : vector<1x1x2x128xf32> to vector<2x128xf32>
    %c0_14 = arith.constant 0 : index
    %c1_15 = arith.constant 1 : index
    %c0_16 = arith.constant 0 : index
    %c0_17 = arith.constant 0 : index
    %11 = vector.load %arg3[%c0_14, %c1_15, %c0_16, %c0_17] : memref<1x3x2x128xf32, #tpu.memory_space<vmem>>, vector<1x1x2x128xf32>
    %12 = vector.shape_cast %11 : vector<1x1x2x128xf32> to vector<2x128xf32>
    %c0_18 = arith.constant 0 : index
    %c2_19 = arith.constant 2 : index
    %c0_20 = arith.constant 0 : index
    %c0_21 = arith.constant 0 : index
    %13 = vector.load %arg3[%c0_18, %c2_19, %c0_20, %c0_21] : memref<1x3x2x128xf32, #tpu.memory_space<vmem>>, vector<1x1x2x128xf32>
    %14 = vector.shape_cast %13 : vector<1x1x2x128xf32> to vector<2x128xf32>
    %c0_22 = arith.constant 0 : index
    %c0_23 = arith.constant 0 : index
    %15 = memref.load %arg4[%c0_22, %c0_23] : memref<3x5xf32, #tpu.memory_space<smem>>
    %16 = vector.broadcast %15 : f32 to vector<2x128xf32>
    %17 = arith.mulf %16, %4 : vector<2x128xf32>
    %c1_24 = arith.constant 1 : index
    %c0_25 = arith.constant 0 : index
    %18 = memref.load %arg4[%c1_24, %c0_25] : memref<3x5xf32, #tpu.memory_space<smem>>
    %19 = vector.broadcast %18 : f32 to vector<2x128xf32>
    %20 = arith.mulf %19, %6 : vector<2x128xf32>
    %21 = arith.addf %17, %20 : vector<2x128xf32>
    %c2_26 = arith.constant 2 : index
    %c0_27 = arith.constant 0 : index
    %22 = memref.load %arg4[%c2_26, %c0_27] : memref<3x5xf32, #tpu.memory_space<smem>>
    %23 = vector.broadcast %22 : f32 to vector<2x128xf32>
    %24 = arith.mulf %23, %8 : vector<2x128xf32>
    %25 = arith.addf %21, %24 : vector<2x128xf32>
    %c0_28 = arith.constant 0 : index
    %c0_29 = arith.constant 0 : index
    %26 = memref.load %arg4[%c0_28, %c0_29] : memref<3x5xf32, #tpu.memory_space<smem>>
    %27 = vector.broadcast %26 : f32 to vector<2x128xf32>
    %28 = arith.mulf %27, %10 : vector<2x128xf32>
    %c1_30 = arith.constant 1 : index
    %c0_31 = arith.constant 0 : index
    %29 = memref.load %arg4[%c1_30, %c0_31] : memref<3x5xf32, #tpu.memory_space<smem>>
    %30 = vector.broadcast %29 : f32 to vector<2x128xf32>
    %31 = arith.mulf %30, %12 : vector<2x128xf32>
    %32 = arith.addf %28, %31 : vector<2x128xf32>
    %c2_32 = arith.constant 2 : index
    %c0_33 = arith.constant 0 : index
    %33 = memref.load %arg4[%c2_32, %c0_33] : memref<3x5xf32, #tpu.memory_space<smem>>
    %34 = vector.broadcast %33 : f32 to vector<2x128xf32>
    %35 = arith.mulf %34, %14 : vector<2x128xf32>
    %36 = arith.addf %32, %35 : vector<2x128xf32>
    %cst = arith.constant dense<0xFF800000> : vector<128xf32>
    %37 = vector.multi_reduction <maximumf>, %25, %cst [0] : vector<2x128xf32> to vector<128xf32>
    %38 = vector.shape_cast %37 : vector<128xf32> to vector<1x128xf32>
    %cst_34 = arith.constant dense<0xFF800000> : vector<128xf32>
    %39 = vector.multi_reduction <maximumf>, %36, %cst_34 [0] : vector<2x128xf32> to vector<128xf32>
    %40 = vector.shape_cast %39 : vector<128xf32> to vector<1x128xf32>
    %c0_35 = arith.constant 0 : index
    %c0_36 = arith.constant 0 : index
    %41 = vector.load %arg7[%c0_35, %c0_36] : memref<5x128xf32, #tpu.memory_space<vmem>>, vector<1x128xf32>
    %42 = arith.maximumf %41, %38 : vector<1x128xf32>
    %c0_37 = arith.constant 0 : index
    %c0_38 = arith.constant 0 : index
    %43 = vector.load %arg7[%c0_37, %c0_38] : memref<5x128xf32, #tpu.memory_space<vmem>>, vector<1x128xf32>
    tpu.vector_store %arg7[%c0_37, %c0_38], %42 {strides = array<i32>} : memref<5x128xf32, #tpu.memory_space<vmem>>, vector<1x128xf32>,
    %c0_39 = arith.constant 0 : index
    %c0_40 = arith.constant 0 : index
    %44 = vector.load %arg8[%c0_39, %c0_40] : memref<5x128xf32, #tpu.memory_space<vmem>>, vector<1x128xf32>
    %45 = arith.maximumf %44, %40 : vector<1x128xf32>
    %c0_41 = arith.constant 0 : index
    %c0_42 = arith.constant 0 : index
    %46 = vector.load %arg8[%c0_41, %c0_42] : memref<5x128xf32, #tpu.memory_space<vmem>>, vector<1x128xf32>
    tpu.vector_store %arg8[%c0_41, %c0_42], %45 {strides = array<i32>} : memref<5x128xf32, #tpu.memory_space<vmem>>, vector<1x128xf32>,
    %c0_43 = arith.constant 0 : index
    %c1_44 = arith.constant 1 : index
    %47 = memref.load %arg4[%c0_43, %c1_44] : memref<3x5xf32, #tpu.memory_space<smem>>
    %48 = vector.broadcast %47 : f32 to vector<2x128xf32>
    %49 = arith.mulf %48, %4 : vector<2x128xf32>
    %c1_45 = arith.constant 1 : index
    %c1_46 = arith.constant 1 : index
    %50 = memref.load %arg4[%c1_45, %c1_46] : memref<3x5xf32, #tpu.memory_space<smem>>
    %51 = vector.broadcast %50 : f32 to vector<2x128xf32>
    %52 = arith.mulf %51, %6 : vector<2x128xf32>
    %53 = arith.addf %49, %52 : vector<2x128xf32>
    %c2_47 = arith.constant 2 : index
    %c1_48 = arith.constant 1 : index
    %54 = memref.load %arg4[%c2_47, %c1_48] : memref<3x5xf32, #tpu.memory_space<smem>>
    %55 = vector.broadcast %54 : f32 to vector<2x128xf32>
    %56 = arith.mulf %55, %8 : vector<2x128xf32>
    %57 = arith.addf %53, %56 : vector<2x128xf32>
    %c0_49 = arith.constant 0 : index
    %c1_50 = arith.constant 1 : index
    %58 = memref.load %arg4[%c0_49, %c1_50] : memref<3x5xf32, #tpu.memory_space<smem>>
    %59 = vector.broadcast %58 : f32 to vector<2x128xf32>
    %60 = arith.mulf %59, %10 : vector<2x128xf32>
    %c1_51 = arith.constant 1 : index
    %c1_52 = arith.constant 1 : index
    %61 = memref.load %arg4[%c1_51, %c1_52] : memref<3x5xf32, #tpu.memory_space<smem>>
    %62 = vector.broadcast %61 : f32 to vector<2x128xf32>
    %63 = arith.mulf %62, %12 : vector<2x128xf32>
    %64 = arith.addf %60, %63 : vector<2x128xf32>
    %c2_53 = arith.constant 2 : index
    %c1_54 = arith.constant 1 : index
    %65 = memref.load %arg4[%c2_53, %c1_54] : memref<3x5xf32, #tpu.memory_space<smem>>
    %66 = vector.broadcast %65 : f32 to vector<2x128xf32>
    %67 = arith.mulf %66, %14 : vector<2x128xf32>
    %68 = arith.addf %64, %67 : vector<2x128xf32>
    %cst_55 = arith.constant dense<0xFF800000> : vector<128xf32>
    %69 = vector.multi_reduction <maximumf>, %57, %cst_55 [0] : vector<2x128xf32> to vector<128xf32>
    %70 = vector.shape_cast %69 : vector<128xf32> to vector<1x128xf32>
    %cst_56 = arith.constant dense<0xFF800000> : vector<128xf32>
    %71 = vector.multi_reduction <maximumf>, %68, %cst_56 [0] : vector<2x128xf32> to vector<128xf32>
    %72 = vector.shape_cast %71 : vector<128xf32> to vector<1x128xf32>
    %c1_57 = arith.constant 1 : index
    %c0_58 = arith.constant 0 : index
    %73 = vector.load %arg7[%c1_57, %c0_58] : memref<5x128xf32, #tpu.memory_space<vmem>>, vector<1x128xf32>
    %74 = arith.maximumf %73, %70 : vector<1x128xf32>
    %c1_59 = arith.constant 1 : index
    %c0_60 = arith.constant 0 : index
    %75 = vector.load %arg7[%c1_59, %c0_60] : memref<5x128xf32, #tpu.memory_space<vmem>>, vector<1x128xf32>
    tpu.vector_store %arg7[%c1_59, %c0_60], %74 {strides = array<i32>} : memref<5x128xf32, #tpu.memory_space<vmem>>, vector<1x128xf32>,
    %c1_61 = arith.constant 1 : index
    %c0_62 = arith.constant 0 : index
    %76 = vector.load %arg8[%c1_61, %c0_62] : memref<5x128xf32, #tpu.memory_space<vmem>>, vector<1x128xf32>
    %77 = arith.maximumf %76, %72 : vector<1x128xf32>
    %c1_63 = arith.constant 1 : index
    %c0_64 = arith.constant 0 : index
    %78 = vector.load %arg8[%c1_63, %c0_64] : memref<5x128xf32, #tpu.memory_space<vmem>>, vector<1x128xf32>
    tpu.vector_store %arg8[%c1_63, %c0_64], %77 {strides = array<i32>} : memref<5x128xf32, #tpu.memory_space<vmem>>, vector<1x128xf32>,
    %c0_65 = arith.constant 0 : index
    %c2_66 = arith.constant 2 : index
    %79 = memref.load %arg4[%c0_65, %c2_66] : memref<3x5xf32, #tpu.memory_space<smem>>
    %80 = vector.broadcast %79 : f32 to vector<2x128xf32>
    %81 = arith.mulf %80, %4 : vector<2x128xf32>
    %c1_67 = arith.constant 1 : index
    %c2_68 = arith.constant 2 : index
    %82 = memref.load %arg4[%c1_67, %c2_68] : memref<3x5xf32, #tpu.memory_space<smem>>
    %83 = vector.broadcast %82 : f32 to vector<2x128xf32>
    %84 = arith.mulf %83, %6 : vector<2x128xf32>
    %85 = arith.addf %81, %84 : vector<2x128xf32>
    %c2_69 = arith.constant 2 : index
    %c2_70 = arith.constant 2 : index
    %86 = memref.load %arg4[%c2_69, %c2_70] : memref<3x5xf32, #tpu.memory_space<smem>>
    %87 = vector.broadcast %86 : f32 to vector<2x128xf32>
    %88 = arith.mulf %87, %8 : vector<2x128xf32>
    %89 = arith.addf %85, %88 : vector<2x128xf32>
    %c0_71 = arith.constant 0 : index
    %c2_72 = arith.constant 2 : index
    %90 = memref.load %arg4[%c0_71, %c2_72] : memref<3x5xf32, #tpu.memory_space<smem>>
    %91 = vector.broadcast %90 : f32 to vector<2x128xf32>
    %92 = arith.mulf %91, %10 : vector<2x128xf32>
    %c1_73 = arith.constant 1 : index
    %c2_74 = arith.constant 2 : index
    %93 = memref.load %arg4[%c1_73, %c2_74] : memref<3x5xf32, #tpu.memory_space<smem>>
    %94 = vector.broadcast %93 : f32 to vector<2x128xf32>
    %95 = arith.mulf %94, %12 : vector<2x128xf32>
    %96 = arith.addf %92, %95 : vector<2x128xf32>
    %c2_75 = arith.constant 2 : index
    %c2_76 = arith.constant 2 : index
    %97 = memref.load %arg4[%c2_75, %c2_76] : memref<3x5xf32, #tpu.memory_space<smem>>
    %98 = vector.broadcast %97 : f32 to vector<2x128xf32>
    %99 = arith.mulf %98, %14 : vector<2x128xf32>
    %100 = arith.addf %96, %99 : vector<2x128xf32>
    %cst_77 = arith.constant dense<0xFF800000> : vector<128xf32>
    %101 = vector.multi_reduction <maximumf>, %89, %cst_77 [0] : vector<2x128xf32> to vector<128xf32>
    %102 = vector.shape_cast %101 : vector<128xf32> to vector<1x128xf32>
    %cst_78 = arith.constant dense<0xFF800000> : vector<128xf32>
    %103 = vector.multi_reduction <maximumf>, %100, %cst_78 [0] : vector<2x128xf32> to vector<128xf32>
    %104 = vector.shape_cast %103 : vector<128xf32> to vector<1x128xf32>
    %c2_79 = arith.constant 2 : index
    %c0_80 = arith.constant 0 : index
    %105 = vector.load %arg7[%c2_79, %c0_80] : memref<5x128xf32, #tpu.memory_space<vmem>>, vector<1x128xf32>
    %106 = arith.maximumf %105, %102 : vector<1x128xf32>
    %c2_81 = arith.constant 2 : index
    %c0_82 = arith.constant 0 : index
    %107 = vector.load %arg7[%c2_81, %c0_82] : memref<5x128xf32, #tpu.memory_space<vmem>>, vector<1x128xf32>
    tpu.vector_store %arg7[%c2_81, %c0_82], %106 {strides = array<i32>} : memref<5x128xf32, #tpu.memory_space<vmem>>, vector<1x128xf32>,
    %c2_83 = arith.constant 2 : index
    %c0_84 = arith.constant 0 : index
    %108 = vector.load %arg8[%c2_83, %c0_84] : memref<5x128xf32, #tpu.memory_space<vmem>>, vector<1x128xf32>
    %109 = arith.maximumf %108, %104 : vector<1x128xf32>
    %c2_85 = arith.constant 2 : index
    %c0_86 = arith.constant 0 : index
    %110 = vector.load %arg8[%c2_85, %c0_86] : memref<5x128xf32, #tpu.memory_space<vmem>>, vector<1x128xf32>
    tpu.vector_store %arg8[%c2_85, %c0_86], %109 {strides = array<i32>} : memref<5x128xf32, #tpu.memory_space<vmem>>, vector<1x128xf32>,
    %c0_87 = arith.constant 0 : index
    %c3 = arith.constant 3 : index
    %111 = memref.load %arg4[%c0_87, %c3] : memref<3x5xf32, #tpu.memory_space<smem>>
    %112 = vector.broadcast %111 : f32 to vector<2x128xf32>
    %113 = arith.mulf %112, %4 : vector<2x128xf32>
    %c1_88 = arith.constant 1 : index
    %c3_89 = arith.constant 3 : index
    %114 = memref.load %arg4[%c1_88, %c3_89] : memref<3x5xf32, #tpu.memory_space<smem>>
    %115 = vector.broadcast %114 : f32 to vector<2x128xf32>
    %116 = arith.mulf %115, %6 : vector<2x128xf32>
    %117 = arith.addf %113, %116 : vector<2x128xf32>
    %c2_90 = arith.constant 2 : index
    %c3_91 = arith.constant 3 : index
    %118 = memref.load %arg4[%c2_90, %c3_91] : memref<3x5xf32, #tpu.memory_space<smem>>
    %119 = vector.broadcast %118 : f32 to vector<2x128xf32>
    %120 = arith.mulf %119, %8 : vector<2x128xf32>
    %121 = arith.addf %117, %120 : vector<2x128xf32>
    %c0_92 = arith.constant 0 : index
    %c3_93 = arith.constant 3 : index
    %122 = memref.load %arg4[%c0_92, %c3_93] : memref<3x5xf32, #tpu.memory_space<smem>>
    %123 = vector.broadcast %122 : f32 to vector<2x128xf32>
    %124 = arith.mulf %123, %10 : vector<2x128xf32>
    %c1_94 = arith.constant 1 : index
    %c3_95 = arith.constant 3 : index
    %125 = memref.load %arg4[%c1_94, %c3_95] : memref<3x5xf32, #tpu.memory_space<smem>>
    %126 = vector.broadcast %125 : f32 to vector<2x128xf32>
    %127 = arith.mulf %126, %12 : vector<2x128xf32>
    %128 = arith.addf %124, %127 : vector<2x128xf32>
    %c2_96 = arith.constant 2 : index
    %c3_97 = arith.constant 3 : index
    %129 = memref.load %arg4[%c2_96, %c3_97] : memref<3x5xf32, #tpu.memory_space<smem>>
    %130 = vector.broadcast %129 : f32 to vector<2x128xf32>
    %131 = arith.mulf %130, %14 : vector<2x128xf32>
    %132 = arith.addf %128, %131 : vector<2x128xf32>
    %cst_98 = arith.constant dense<0xFF800000> : vector<128xf32>
    %133 = vector.multi_reduction <maximumf>, %121, %cst_98 [0] : vector<2x128xf32> to vector<128xf32>
    %134 = vector.shape_cast %133 : vector<128xf32> to vector<1x128xf32>
    %cst_99 = arith.constant dense<0xFF800000> : vector<128xf32>
    %135 = vector.multi_reduction <maximumf>, %132, %cst_99 [0] : vector<2x128xf32> to vector<128xf32>
    %136 = vector.shape_cast %135 : vector<128xf32> to vector<1x128xf32>
    %c3_100 = arith.constant 3 : index
    %c0_101 = arith.constant 0 : index
    %137 = vector.load %arg7[%c3_100, %c0_101] : memref<5x128xf32, #tpu.memory_space<vmem>>, vector<1x128xf32>
    %138 = arith.maximumf %137, %134 : vector<1x128xf32>
    %c3_102 = arith.constant 3 : index
    %c0_103 = arith.constant 0 : index
    %139 = vector.load %arg7[%c3_102, %c0_103] : memref<5x128xf32, #tpu.memory_space<vmem>>, vector<1x128xf32>
    tpu.vector_store %arg7[%c3_102, %c0_103], %138 {strides = array<i32>} : memref<5x128xf32, #tpu.memory_space<vmem>>, vector<1x128xf32>,
    %c3_104 = arith.constant 3 : index
    %c0_105 = arith.constant 0 : index
    %140 = vector.load %arg8[%c3_104, %c0_105] : memref<5x128xf32, #tpu.memory_space<vmem>>, vector<1x128xf32>
    %141 = arith.maximumf %140, %136 : vector<1x128xf32>
    %c3_106 = arith.constant 3 : index
    %c0_107 = arith.constant 0 : index
    %142 = vector.load %arg8[%c3_106, %c0_107] : memref<5x128xf32, #tpu.memory_space<vmem>>, vector<1x128xf32>
    tpu.vector_store %arg8[%c3_106, %c0_107], %141 {strides = array<i32>} : memref<5x128xf32, #tpu.memory_space<vmem>>, vector<1x128xf32>,
    %c0_108 = arith.constant 0 : index
    %c4 = arith.constant 4 : index
    %143 = memref.load %arg4[%c0_108, %c4] : memref<3x5xf32, #tpu.memory_space<smem>>
    %144 = vector.broadcast %143 : f32 to vector<2x128xf32>
    %145 = arith.mulf %144, %4 : vector<2x128xf32>
    %c1_109 = arith.constant 1 : index
    %c4_110 = arith.constant 4 : index
    %146 = memref.load %arg4[%c1_109, %c4_110] : memref<3x5xf32, #tpu.memory_space<smem>>
    %147 = vector.broadcast %146 : f32 to vector<2x128xf32>
    %148 = arith.mulf %147, %6 : vector<2x128xf32>
    %149 = arith.addf %145, %148 : vector<2x128xf32>
    %c2_111 = arith.constant 2 : index
    %c4_112 = arith.constant 4 : index
    %150 = memref.load %arg4[%c2_111, %c4_112] : memref<3x5xf32, #tpu.memory_space<smem>>
    %151 = vector.broadcast %150 : f32 to vector<2x128xf32>
    %152 = arith.mulf %151, %8 : vector<2x128xf32>
    %153 = arith.addf %149, %152 : vector<2x128xf32>
    %c0_113 = arith.constant 0 : index
    %c4_114 = arith.constant 4 : index
    %154 = memref.load %arg4[%c0_113, %c4_114] : memref<3x5xf32, #tpu.memory_space<smem>>
    %155 = vector.broadcast %154 : f32 to vector<2x128xf32>
    %156 = arith.mulf %155, %10 : vector<2x128xf32>
    %c1_115 = arith.constant 1 : index
    %c4_116 = arith.constant 4 : index
    %157 = memref.load %arg4[%c1_115, %c4_116] : memref<3x5xf32, #tpu.memory_space<smem>>
    %158 = vector.broadcast %157 : f32 to vector<2x128xf32>
    %159 = arith.mulf %158, %12 : vector<2x128xf32>
    %160 = arith.addf %156, %159 : vector<2x128xf32>
    %c2_117 = arith.constant 2 : index
    %c4_118 = arith.constant 4 : index
    %161 = memref.load %arg4[%c2_117, %c4_118] : memref<3x5xf32, #tpu.memory_space<smem>>
    %162 = vector.broadcast %161 : f32 to vector<2x128xf32>
    %163 = arith.mulf %162, %14 : vector<2x128xf32>
    %164 = arith.addf %160, %163 : vector<2x128xf32>
    %cst_119 = arith.constant dense<0xFF800000> : vector<128xf32>
    %165 = vector.multi_reduction <maximumf>, %153, %cst_119 [0] : vector<2x128xf32> to vector<128xf32>
    %166 = vector.shape_cast %165 : vector<128xf32> to vector<1x128xf32>
    %cst_120 = arith.constant dense<0xFF800000> : vector<128xf32>
    %167 = vector.multi_reduction <maximumf>, %164, %cst_120 [0] : vector<2x128xf32> to vector<128xf32>
    %168 = vector.shape_cast %167 : vector<128xf32> to vector<1x128xf32>
    %c4_121 = arith.constant 4 : index
    %c0_122 = arith.constant 0 : index
    %169 = vector.load %arg7[%c4_121, %c0_122] : memref<5x128xf32, #tpu.memory_space<vmem>>, vector<1x128xf32>
    %170 = arith.maximumf %169, %166 : vector<1x128xf32>
    %c4_123 = arith.constant 4 : index
    %c0_124 = arith.constant 0 : index
    %171 = vector.load %arg7[%c4_123, %c0_124] : memref<5x128xf32, #tpu.memory_space<vmem>>, vector<1x128xf32>
    tpu.vector_store %arg7[%c4_123, %c0_124], %170 {strides = array<i32>} : memref<5x128xf32, #tpu.memory_space<vmem>>, vector<1x128xf32>,
    %c4_125 = arith.constant 4 : index
    %c0_126 = arith.constant 0 : index
    %172 = vector.load %arg8[%c4_125, %c0_126] : memref<5x128xf32, #tpu.memory_space<vmem>>, vector<1x128xf32>
    %173 = arith.maximumf %172, %168 : vector<1x128xf32>
    %c4_127 = arith.constant 4 : index
    %c0_128 = arith.constant 0 : index
    %174 = vector.load %arg8[%c4_127, %c0_128] : memref<5x128xf32, #tpu.memory_space<vmem>>, vector<1x128xf32>
    tpu.vector_store %arg8[%c4_127, %c0_128], %173 {strides = array<i32>} : memref<5x128xf32, #tpu.memory_space<vmem>>, vector<1x128xf32>,
    %c0_i32_129 = arith.constant 0 : i32
    %175 = arith.cmpi eq, %arg1, %c0_i32_129 : i32
    %176 = arith.extui %175 : i1 to i32
    %c0_i32_130 = arith.constant 0 : i32
    %177 = arith.cmpi ne, %176, %c0_i32_130 : i32
    scf.if %177 {
      %c0_131 = arith.constant 0 : index
      %c0_132 = arith.constant 0 : index
      %178 = vector.load %arg7[%c0_131, %c0_132] : memref<5x128xf32, #tpu.memory_space<vmem>>, vector<5x128xf32>
      %cst_133 = arith.constant dense<0xFF800000> : vector<5xf32>
      %179 = vector.multi_reduction <maximumf>, %178, %cst_133 [1] : vector<5x128xf32> to vector<5xf32>
      %180 = vector.shape_cast %179 : vector<5xf32> to vector<5x1xf32>
      %c0_134 = arith.constant 0 : index
      %c0_135 = arith.constant 0 : index
      %181 = vector.load %arg8[%c0_134, %c0_135] : memref<5x128xf32, #tpu.memory_space<vmem>>, vector<5x128xf32>
      %cst_136 = arith.constant dense<0xFF800000> : vector<5xf32>
      %182 = vector.multi_reduction <maximumf>, %181, %cst_136 [1] : vector<5x128xf32> to vector<5xf32>
      %183 = vector.shape_cast %182 : vector<5xf32> to vector<5x1xf32>
      %c0_137 = arith.constant 0 : index
      %c0_138 = arith.constant 0 : index
      %184 = vector.load %arg5[%c0_137, %c0_138] : memref<5x1xf32, #tpu.memory_space<vmem>>, vector<5x1xf32>
      %185 = arith.addf %180, %184 : vector<5x1xf32>
      %cst_139 = arith.constant 0.000000e+00 : f32
      %cst_140 = arith.constant 5.000000e+00 : f32
      %186 = vector.broadcast %cst_139 : f32 to vector<5x1xf32>
      %187 = arith.maximumf %186, %185 : vector<5x1xf32>
      %188 = vector.broadcast %cst_140 : f32 to vector<5x1xf32>
      %189 = arith.minimumf %188, %187 : vector<5x1xf32>
      %190 = arith.addf %183, %184 : vector<5x1xf32>
      %cst_141 = arith.constant 0.000000e+00 : f32
      %cst_142 = arith.constant 5.000000e+00 : f32
      %191 = vector.broadcast %cst_141 : f32 to vector<5x1xf32>
      %192 = arith.maximumf %191, %190 : vector<5x1xf32>
      %193 = vector.broadcast %cst_142 : f32 to vector<5x1xf32>
      %194 = arith.minimumf %193, %192 : vector<5x1xf32>
      %195 = arith.subf %189, %194 : vector<5x1xf32>
      %196 = math.absf %195 : vector<5x1xf32>
      %197 = vector.shape_cast %196 : vector<5x1xf32> to vector<1x5x1xf32>
      %cst_143 = arith.constant dense<0.000000e+00> : vector<1xf32>
      %198 = vector.multi_reduction <add>, %197, %cst_143 [1, 2] : vector<1x5x1xf32> to vector<1xf32>
      %199 = vector.shape_cast %198 : vector<1xf32> to vector<1x1x1xf32>
      %200 = vector.extract %199[0, 0, 0] : f32 from vector<1x1x1xf32>
      %201 = vector.broadcast %200 : f32 to vector<1x1xf32>
      %cst_144 = arith.constant 4.000000e-02 : f32
      %202 = vector.broadcast %cst_144 : f32 to vector<1x1xf32>
      %203 = arith.mulf %201, %202 : vector<1x1xf32>
      %c0_145 = arith.constant 0 : index
      %c0_146 = arith.constant 0 : index
      %c0_147 = arith.constant 0 : index
      %204 = vector.load %arg6[%c0_145, %c0_146, %c0_147] : memref<1x1x1xf32, #tpu.memory_space<vmem>>, vector<1x1x1xf32>
      %205 = vector.shape_cast %204 : vector<1x1x1xf32> to vector<1x1xf32>
      %206 = vector.shape_cast %203 : vector<1x1xf32> to vector<1x1x1xf32>
      tpu.vector_store %arg6[%c0_145, %c0_146, %c0_147], %206 {strides = array<i32>} : memref<1x1x1xf32, #tpu.memory_space<vmem>>, vector<1x1x1xf32>,
    } else {
    }
    return
  }
  func.func @transform_0(%arg0: i32, %arg1: i32) -> (i32, i32, i32, i32) {
    %c0_i32 = arith.constant 0 : i32
    %c0_i32_0 = arith.constant 0 : i32
    %c0_i32_1 = arith.constant 0 : i32
    return %arg0, %c0_i32, %arg1, %c0_i32_0 : i32, i32, i32, i32
  }
  func.func @transform_1(%arg0: i32, %arg1: i32) -> (i32, i32, i32, i32) {
    %c0_i32 = arith.constant 0 : i32
    %c0_i32_0 = arith.constant 0 : i32
    %c0_i32_1 = arith.constant 0 : i32
    return %arg0, %c0_i32, %arg1, %c0_i32_0 : i32, i32, i32, i32
  }
  func.func @transform_2(%arg0: i32, %arg1: i32) -> (i32, i32) {
    %c0_i32 = arith.constant 0 : i32
    %c0_i32_0 = arith.constant 0 : i32
    %c0_i32_1 = arith.constant 0 : i32
    return %c0_i32, %c0_i32_0 : i32, i32
  }
  func.func @transform_3(%arg0: i32, %arg1: i32) -> (i32, i32) {
    %c0_i32 = arith.constant 0 : i32
    %c0_i32_0 = arith.constant 0 : i32
    %c0_i32_1 = arith.constant 0 : i32
    return %c0_i32, %c0_i32_0 : i32, i32
  }
  func.func @transform_4(%arg0: i32, %arg1: i32) -> (i32, i32, i32) {
    %c0_i32 = arith.constant 0 : i32
    %c0_i32_0 = arith.constant 0 : i32
    %c0_i32_1 = arith.constant 0 : i32
    return %arg0, %c0_i32, %c0_i32_0 : i32, i32, i32
  }
}

</mosaic_0001>

<llo_original>
// kernel: tpu_custom_call.1
$region0: #{tpu_custom_call.1}
  #allocation0 [shape = 'u32[]', space=smem, size = 0x4, offset = 0x4, fixed_abs, tag = 'smem constant byte address 0x4 - core index']
  #allocation1 [shape = 'u32[144,128]{1,0:T(1,128)}', space=vmem, size = 0x12000, scoped, tag = 'internal scratch']
  #allocation2 [shape = 'f32[5,128]{1,0:T(8,128)}', space=vmem, size = 0x1000, scoped, tag = 'scratch operand']
  #allocation3 [shape = 'f32[5,128]{1,0:T(8,128)}', space=vmem, size = 0x1000, scoped, tag = 'scratch operand']
  %s0 = inlined_call_operand.hbm [shape: f32[2,3,2,128], index: 0, kind: input, shape index: {}]
  %s1 = inlined_call_operand.vmem [shape: f32[2,3,2,128], index: 1, kind: input, shape index: {}]
  %s2 = inlined_call_operand.vmem [shape: f32[3,5], index: 2, kind: input, shape index: {}]
  %s3 = inlined_call_operand.vmem [shape: f32[5,1], index: 3, kind: input, shape index: {}]
  %s4 = inlined_call_operand.vmem [shape: f32[2,1,1], index: 4, kind: output, shape index: {}]
  %s5 = sld [smem:[#allocation0]]
  $region65: #{tpu_custom_call.1} parent=0
    _
  %s7 = ssub.s32 1, %s5
  %s8 = scalar_select 0, %s7, %s5
  $region1: #{tpu_custom_call.1} parent=0
    #allocation4 [shape = 'u8[6144]{0}', space=vmem, size = 0x1800, scoped, tag = 'input window, operand 0']
    #allocation5 [shape = 's32[2]{0}', space=sflag, size = 0x8, scoped, tag = 'scoped memory for tpu_custom_call.1']
    #allocation6 [shape = 's32[2]{0}', space=sflag, size = 0x8, scoped, tag = 'scoped memory for tpu_custom_call.1']
    #allocation7 [shape = 'u8[2048]{0}', space=smem, size = 0x800, scoped, tag = 'input window, operand 2, single buffered']
    %9 = vsyncpa [#allocation5], 0
    %s10 = scalar_lea.sflag [#allocation5], 1
    %11 = vsyncpa %s10, 0
    %12 = vsyncpa [#allocation6], 0
    loop: start=0, step=1, limit=4
    $region2: #{tpu_custom_call.1} parent=1 // loop_pre_header
      _
    $region3: #{tpu_custom_call.1} parent=1 // loop_header
      %s14 = sphi 0, %s18
      %p15 = scmp.ge.s32.totalorder %s14, 4
      %s21 = sphi 0, %s33
      %s22 = sphi 0, %s29
      %s23 = sphi 0, %s21
      %s24 = sphi 0, %s22
      %s25 = sphi 0, %s23
      %s26 = sphi 0, %s24
      %s38 = sphi 0, %s40
      %s41 = sphi 0, %s38
      %s42 = sphi 0, %s41
      %s58 = sphi 0, %s42
      %s66 = sphi 0, %s68
      %s69 = sphi 0, %s66
      %s70 = sphi 0, %s69
      %s86 = sphi 0, %s70
      %s90 = sphi 0, %s90
      %s92 = sphi 0, %s90
      %s93 = sphi 0, %s92
      %s107 = sphi 0, %s93
      %s111 = sphi 0, %s111
      %s113 = sphi 0, %s111
      %s114 = sphi 0, %s113
      %s128 = sphi 0, %s114
      %s134 = sphi 0, %s136
      %s137 = sphi 0, %s134
      %s138 = sphi 0, %s137
      %s154 = sphi 0, %s138
    $region4: #{tpu_custom_call.1} parent=1 // loop_header_branch
      %17 = sbr.rel (%p15) target = $region8
    $region5: #{tpu_custom_call.1} parent=1 // loop_body
      %s19 = ssub.s32 %s14, 1
      %s20 = ssub.s32 %s14, 2
      %s27 = sadd.s32 1, %s22
      %p28 = scmp.ge.s32.totalorder %s27, 1
      %s29 = scalar_select %p28, 0, %s27
      %s30 = sadd.s32 1, %s21
      %s31 = scalar_select %p28, %s30, %s21
      %p32 = scmp.ge.s32.totalorder %s31, 2
      %s33 = scalar_select %p32, 0, %s31
      %s34 = ssub.s32 %s21, %s33
      %s35 = ssub.s32 %s22, %s29
      %s36 = sor.u32 %s34, %s35
      %p37 = scmp.eq.s32.totalorder %s36, 0
      %s39 = sadd.s32 %s38, 1
      %s40 = scalar_select %p37, %s38, %s39
      %p43 = pneg %p37
      %p44 = scmp.eq.s32.totalorder %s14, 1
      %p45 = por %p43, %p44
      %p46 = scmp.ne.s32.totalorder %s38, %s41
      %p47 = scmp.eq.s32.totalorder %s14, 0
      %p48 = por %p46, %p47
      %p49 = scmp.ne.s32.totalorder %s38, %s41
      %p50 = scmp.eq.s32.totalorder %s19, 1
      %p51 = por %p49, %p50
      %p52 = scmp.ne.s32.totalorder %s41, %s42
      %p53 = scmp.eq.s32.totalorder %s19, 0
      %p54 = por %p52, %p53
      %p55 = scmp.ne.s32.totalorder %s41, %s42
      %p56 = scmp.eq.s32.totalorder %s20, 1
      %p57 = por %p55, %p56
      %p59 = scmp.ne.s32.totalorder %s42, %s58
      %p60 = scmp.eq.s32.totalorder %s20, 0
      %p61 = por %p59, %p60
      %s62 = ssub.s32 %s21, %s33
      %s63 = ssub.s32 %s22, %s29
      %s64 = sor.u32 %s62, %s63
      %p65 = scmp.eq.s32.totalorder %s64, 0
      %s67 = sadd.s32 %s66, 1
      %s68 = scalar_select %p65, %s66, %s67
      %p71 = pneg %p65
      %p72 = scmp.eq.s32.totalorder %s14, 1
      %p73 = por %p71, %p72
      %p74 = scmp.ne.s32.totalorder %s66, %s69
      %p75 = scmp.eq.s32.totalorder %s14, 0
      %p76 = por %p74, %p75
      %p77 = scmp.ne.s32.totalorder %s66, %s69
      %p78 = scmp.eq.s32.totalorder %s19, 1
      %p79 = por %p77, %p78
      %p80 = scmp.ne.s32.totalorder %s69, %s70
      %p81 = scmp.eq.s32.totalorder %s19, 0
      %p82 = por %p80, %p81
      %p83 = scmp.ne.s32.totalorder %s69, %s70
      %p84 = scmp.eq.s32.totalorder %s20, 1
      %p85 = por %p83, %p84
      %p87 = scmp.ne.s32.totalorder %s70, %s86
      %p88 = scmp.eq.s32.totalorder %s20, 0
      %p89 = por %p87, %p88
      %s91 = sadd.s32 %s90, 1
      %p94 = scmp.eq.s32.totalorder %s14, 1
      %p95 = scmp.ne.s32.totalorder %s90, %s92
      %p96 = scmp.eq.s32.totalorder %s14, 0
      %p97 = por %p95, %p96
      %p98 = scmp.ne.s32.totalorder %s90, %s92
      %p99 = scmp.eq.s32.totalorder %s19, 1
      %p100 = por %p98, %p99
      %p101 = scmp.ne.s32.totalorder %s92, %s93
      %p102 = scmp.eq.s32.totalorder %s19, 0
      %p103 = por %p101, %p102
      %p104 = scmp.ne.s32.totalorder %s92, %s93
      %p105 = scmp.eq.s32.totalorder %s20, 1
      %p106 = por %p104, %p105
      %p108 = scmp.ne.s32.totalorder %s93, %s107
      %p109 = scmp.eq.s32.totalorder %s20, 0
      %p110 = por %p108, %p109
      %s112 = sadd.s32 %s111, 1
      %p115 = scmp.eq.s32.totalorder %s14, 1
      %p116 = scmp.ne.s32.totalorder %s111, %s113
      %p117 = scmp.eq.s32.totalorder %s14, 0
      %p118 = por %p116, %p117
      %p119 = scmp.ne.s32.totalorder %s111, %s113
      %p120 = scmp.eq.s32.totalorder %s19, 1
      %p121 = por %p119, %p120
      %p122 = scmp.ne.s32.totalorder %s113, %s114
      %p123 = scmp.eq.s32.totalorder %s19, 0
      %p124 = por %p122, %p123
      %p125 = scmp.ne.s32.totalorder %s113, %s114
      %p126 = scmp.eq.s32.totalorder %s20, 1
      %p127 = por %p125, %p126
      %p129 = scmp.ne.s32.totalorder %s114, %s128
      %p130 = scmp.eq.s32.totalorder %s20, 0
      %p131 = por %p129, %p130
      %s132 = ssub.s32 %s21, %s33
      %p133 = scmp.eq.s32.totalorder %s132, 0
      %s135 = sadd.s32 %s134, 1
      %s136 = scalar_select %p133, %s134, %s135
      %p139 = pneg %p133
      %p140 = scmp.eq.s32.totalorder %s14, 1
      %p141 = por %p139, %p140
      %p142 = scmp.ne.s32.totalorder %s134, %s137
      %p143 = scmp.eq.s32.totalorder %s14, 0
      %p144 = por %p142, %p143
      %p145 = scmp.ne.s32.totalorder %s134, %s137
      %p146 = scmp.eq.s32.totalorder %s19, 1
      %p147 = por %p145, %p146
      %p148 = scmp.ne.s32.totalorder %s137, %s138
      %p149 = scmp.eq.s32.totalorder %s19, 0
      %p150 = por %p148, %p149
      %p151 = scmp.ne.s32.totalorder %s137, %s138
      %p152 = scmp.eq.s32.totalorder %s20, 1
      %p153 = por %p151, %p152
      %p155 = scmp.ne.s32.totalorder %s138, %s154
      %p156 = scmp.eq.s32.totalorder %s20, 0
      %p157 = por %p155, %p156
      %p158 = scmp.le.s32.totalorder 1, %s14
      %p159 = scmp.lt.s32.totalorder %s14, 3
      %p160 = pnand %p158, %p159
      %p161 = pneg %p160
      // Predicated region
      $region9: #{tpu_custom_call.1} parent=5 // pred_check
        _
      $region10: #{tpu_custom_call.1} parent=5 // pred_check_branch
        %163 = sbr.rel (%p160) target = $region12
      $region11: #{tpu_custom_call.1} parent=5 // pred_region
        %s164 = ssub.s32 %s14, 1
        // Predicated region
        $region13: #{tpu_custom_call.1} parent=11 // pred_check
          %p165 = pneg %p103
        $region14: #{tpu_custom_call.1} parent=11 // pred_check_branch
          %167 = sbr.rel (%p165) target = $region16
        $region15: #{tpu_custom_call.1} parent=11 // pred_region
          %s169 = ssub.s32 64, 64
          %170 = vsyncadd [#allocation6], %s169
          %s172 = sshll.u32 %s2, 4
          %s173 = int_to_ptr.vmem [resolvable:$true] %s172
          %175 = dma.vmem_to_smem %s173, 64, [#allocation7], [#allocation6]
        $region16: #{tpu_custom_call.1} parent=11 // pred_fallthru
          _
        // Predicated region
        $region17: #{tpu_custom_call.1} parent=11 // pred_check
          %p176 = pneg %p124
        $region18: #{tpu_custom_call.1} parent=11 // pred_check_branch
          %178 = sbr.rel (%p176) target = $region20
        $region19: #{tpu_custom_call.1} parent=11 // pred_region
          _
        $region20: #{tpu_custom_call.1} parent=11 // pred_fallthru
          _
      $region12: #{tpu_custom_call.1} parent=5 // pred_fallthru
        _
      %p179 = scmp.lt.s32.totalorder %s14, 2
      // Predicated region
      $region21: #{tpu_custom_call.1} parent=5 // pred_check
        %p180 = pneg %p179
      $region22: #{tpu_custom_call.1} parent=5 // pred_check_branch
        %182 = sbr.rel (%p180) target = $region24
      $region23: #{tpu_custom_call.1} parent=5 // pred_region
        // Predicated region
        $region25: #{tpu_custom_call.1} parent=23 // pred_check
          %p183 = pneg %p48
        $region26: #{tpu_custom_call.1} parent=23 // pred_check_branch
          %185 = sbr.rel (%p183) target = $region28
        $region27: #{tpu_custom_call.1} parent=23 // pred_region
          %s186 = sand.u32 %s38, 1
          %s187 = scalar_lea.sflag [#allocation5], %s186
          %s188 = sand.u32 %s38, 1
          %s189 = smul.addr %s188, 6
          %s190 = scalar_lea.vmem [#allocation4], %s189
          %s192 = ssub.s32 96, 96
          %193 = vsyncadd %s187, %s192
          %s194 = smul.addr %s21, 3
          %s195 = sadd.s32 %s22, %s194
          %s196 = smul.addr %s195, 32
          %s197 = scalar_lea.hbm %s0, %s196
          %s198 = sshll.u32 %s190, 4
          %s199 = int_to_ptr.vmem [resolvable:$true] %s198
          %204 = dma.hbm_to_vmem [thread:$0]  %s197, 96, %s199, %s187, 32, 32, 2
        $region28: #{tpu_custom_call.1} parent=23 // pred_fallthru
          _
        // Predicated region
        $region29: #{tpu_custom_call.1} parent=23 // pred_check
          %p205 = pneg %p76
        $region30: #{tpu_custom_call.1} parent=23 // pred_check_branch
          %207 = sbr.rel (%p205) target = $region32
        $region31: #{tpu_custom_call.1} parent=23 // pred_region
          %p208 = scmp.lt.s32.totalorder %s21, 1
          %s209 = scalar_select %p208, %s21, 1
          %p210 = scmp.lt.s32.totalorder %s22, 0
          %s211 = scalar_select %p210, %s22, 0
          %s212 = smul.addr %s209, 3
          %s213 = sadd.s32 %s211, %s212
          %s214 = smul.addr %s213, 2
          %s215 = scalar_lea.vmem %s1, %s214
        $region32: #{tpu_custom_call.1} parent=23 // pred_fallthru
          _
      $region24: #{tpu_custom_call.1} parent=5 // pred_fallthru
        _
      %p216 = scmp.le.s32.totalorder 1, %s14
      %p217 = scmp.lt.s32.totalorder %s14, 3
      %p218 = pnand %p216, %p217
      %p219 = pneg %p218
      // Predicated region
      $region33: #{tpu_custom_call.1} parent=5 // pred_check
        _
      $region34: #{tpu_custom_call.1} parent=5 // pred_check_branch
        %221 = sbr.rel (%p218) target = $region36
      $region35: #{tpu_custom_call.1} parent=5 // pred_region
        %s222 = ssub.s32 %s14, 1
        %s223 = sand.u32 %s41, 1
        %s224 = scalar_lea.sflag [#allocation5], %s223
        %s225 = sand.u32 %s41, 1
        %s226 = smul.addr %s225, 6
        %s227 = scalar_lea.vmem [#allocation4], %s226
        // Predicated region
        $region37: #{tpu_custom_call.1} parent=35 // pred_check
          %p228 = pneg %p54
        $region38: #{tpu_custom_call.1} parent=35 // pred_check_branch
          %230 = sbr.rel (%p228) target = $region40
        $region39: #{tpu_custom_call.1} parent=35 // pred_region
          %231 = dma.done %s224, 96
        $region40: #{tpu_custom_call.1} parent=35 // pred_fallthru
          _
        // Predicated region
        $region41: #{tpu_custom_call.1} parent=35 // pred_check
          %p232 = pneg %p103
        $region42: #{tpu_custom_call.1} parent=35 // pred_check_branch
          %234 = sbr.rel (%p232) target = $region44
        $region43: #{tpu_custom_call.1} parent=35 // pred_region
          %235 = dma.done [#allocation6], 64
        $region44: #{tpu_custom_call.1} parent=35 // pred_fallthru
          _
        %236 = sfence
        %s237 = sand.u32 %s41, 1
        %s238 = scalar_lea.sflag [#allocation5], %s237
        %s239 = sand.u32 %s41, 1
        %s240 = smul.addr %s239, 6
        %s241 = scalar_lea.vmem [#allocation4], %s240
        %p242 = pneg %p54
        %p243 = pneg %p51
        %p244 = scmp.lt.s32.totalorder %s23, 1
        %s245 = scalar_select %p244, %s23, 1
        %p246 = scmp.lt.s32.totalorder %s24, 0
        %s247 = scalar_select %p246, %s24, 0
        %s248 = smul.addr %s245, 3
        %s249 = sadd.s32 %s247, %s248
        %s250 = smul.addr %s249, 2
        %s251 = scalar_lea.vmem %s1, %s250
        %p252 = pneg %p82
        %p253 = pneg %p79
        %p254 = pneg %p103
        %p255 = pneg %p100
        %p256 = pneg %p124
        %p257 = pneg %p121
        %p258 = pneg %p150
        %p259 = pneg %p147
        %p260 = scmp.lt.s32.totalorder %s23, 1
        %s261 = scalar_select %p260, %s23, 1
        %s262 = scalar_lea.vmem %s4, %s261
        %p263 = scmp.lt.s32.totalorder %s23, 1
        %s264 = scalar_select %p263, %s23, 1
        %p265 = scmp.lt.s32.totalorder %s24, 0
        %s266 = scalar_select %p265, %s24, 0
        %s267 = smul.addr %s264, 3
        %s268 = sadd.s32 %s266, %s267
        %s269 = smul.addr %s268, 2
        %s270 = scalar_lea.vmem %s1, %s269
        %p271 = scmp.lt.s32.totalorder %s23, 1
        %s272 = scalar_select %p271, %s23, 1
        %s273 = scalar_lea.vmem %s4, %s272
        %p274 = scmp.eq.s32.totalorder %s24, 0
        // Predicated region
        $region45: #{tpu_custom_call.1} parent=35 // pred_check
          %p275 = pneg %p274
        $region46: #{tpu_custom_call.1} parent=35 // pred_check_branch
          %277 = sbr.rel (%p275) target = $region48
        $region47: #{tpu_custom_call.1} parent=35 // pred_region
          %278 = vst [vmem:[#allocation2] sm:$0x1f] -inf
          %279 = vst [vmem:[#allocation3] sm:$0x1f] -inf
        $region48: #{tpu_custom_call.1} parent=35 // pred_fallthru
          _
        %v280 = vld [vmem:[%s227] sm:$0x3]
        %s281 = scalar_lea.vmem %s227, 2 [#allocation4]
        %v282 = vld [vmem:[%s281] sm:$0x3]
        %s283 = scalar_lea.vmem %s227, 4 [#allocation4]
        %v284 = vld [vmem:[%s283] sm:$0x3]
        %v285 = vld [vmem:[%s270] sm:$0x3]
        %s286 = scalar_lea.vmem %s270, 2
        %v287 = vld [vmem:[%s286] sm:$0x3]
        %s288 = scalar_lea.vmem %s270, 4
        %v289 = vld [vmem:[%s288] sm:$0x3]
        %s290 = sld [smem:[#allocation7]]
        %v291 = vstv %s290
        %v292 = vmul.f32 %v291, %v280
        %s293 = sld [smem:[#allocation7 + $0x80]]
        %v294 = vstv %s293
        %v295 = vmul.f32 %v294, %v282
        %v296 = vadd.f32 %v292, %v295
        %s297 = sld [smem:[#allocation7 + $0x100]]
        %v298 = vstv %s297
        %v299 = vmul.f32 %v298, %v284
        %v300 = vadd.f32 %v296, %v299
        %v301 = vmul.f32 %v291, %v285
        %v302 = vmul.f32 %v294, %v287
        %v303 = vadd.f32 %v301, %v302
        %v304 = vmul.f32 %v298, %v289
        %v305 = vadd.f32 %v303, %v304
        %vm306 = vcmask 1041408
        %v307 = vsel %vm306, %v300, -inf
        %v308 = vrot.slane %v307, 4
        %v309 = vmax.f32 %v307, %v308
        %v310 = vrot.slane %v309, 2
        %v311 = vmax.f32 %v309, %v310
        %v312 = vrot.slane %v311, 1
        %v313 = vmax.f32 %v311, %v312
        %v314 = vsel %vm306, %v305, -inf
        %v315 = vrot.slane %v314, 4
        %v316 = vmax.f32 %v314, %v315
        %v317 = vrot.slane %v316, 2
        %v318 = vmax.f32 %v316, %v317
        %v319 = vrot.slane %v318, 1
        %v320 = vmax.f32 %v318, %v319
        %v321 = vld [vmem:[#allocation2] sm:$0x1]
        %v322 = vmax.f32 %v321, %v313
        %323 = vst [vmem:[#allocation2] sm:$0x1] %v322
        %v324 = vld [vmem:[#allocation3] sm:$0x1]
        %v325 = vmax.f32 %v324, %v320
        %326 = vst [vmem:[#allocation3] sm:$0x1] %v325
        %s327 = sld [smem:[#allocation7 + $0x1]]
        %v328 = vstv %s327
        %v329 = vmul.f32 %v328, %v280
        %s330 = sld [smem:[#allocation7 + $0x81]]
        %v331 = vstv %s330
        %v332 = vmul.f32 %v331, %v282
        %v333 = vadd.f32 %v329, %v332
        %s334 = sld [smem:[#allocation7 + $0x101]]
        %v335 = vstv %s334
        %v336 = vmul.f32 %v335, %v284
        %v337 = vadd.f32 %v333, %v336
        %v338 = vmul.f32 %v328, %v285
        %v339 = vmul.f32 %v331, %v287
        %v340 = vadd.f32 %v338, %v339
        %v341 = vmul.f32 %v335, %v289
        %v342 = vadd.f32 %v340, %v341
        %v343 = vsel %vm306, %v337, -inf
        %v344 = vrot.slane %v343, 4
        %v345 = vmax.f32 %v343, %v344
        %v346 = vrot.slane %v345, 2
        %v347 = vmax.f32 %v345, %v346
        %v348 = vrot.slane %v347, 1
        %v349 = vmax.f32 %v347, %v348
        %v350 = vsel %vm306, %v342, -inf
        %v351 = vrot.slane %v350, 4
        %v352 = vmax.f32 %v350, %v351
        %v353 = vrot.slane %v352, 2
        %v354 = vmax.f32 %v352, %v353
        %v355 = vrot.slane %v354, 1
        %v356 = vmax.f32 %v354, %v355
        %v357 = vld [vmem:[#allocation2 + $0x1] sm:$0x1]
        %v358 = vmax.f32 %v357, %v349
        %359 = vst [vmem:[#allocation2 + $0x1] sm:$0x1] %v358
        %v360 = vld [vmem:[#allocation3 + $0x1] sm:$0x1]
        %v361 = vmax.f32 %v360, %v356
        %362 = vst [vmem:[#allocation3 + $0x1] sm:$0x1] %v361
        %s363 = sld [smem:[#allocation7 + $0x2]]
        %v364 = vstv %s363
        %v365 = vmul.f32 %v364, %v280
        %s366 = sld [smem:[#allocation7 + $0x82]]
        %v367 = vstv %s366
        %v368 = vmul.f32 %v367, %v282
        %v369 = vadd.f32 %v365, %v368
        %s370 = sld [smem:[#allocation7 + $0x102]]
        %v371 = vstv %s370
        %v372 = vmul.f32 %v371, %v284
        %v373 = vadd.f32 %v369, %v372
        %v374 = vmul.f32 %v364, %v285
        %v375 = vmul.f32 %v367, %v287
        %v376 = vadd.f32 %v374, %v375
        %v377 = vmul.f32 %v371, %v289
        %v378 = vadd.f32 %v376, %v377
        %v379 = vsel %vm306, %v373, -inf
        %v380 = vrot.slane %v379, 4
        %v381 = vmax.f32 %v379, %v380
        %v382 = vrot.slane %v381, 2
        %v383 = vmax.f32 %v381, %v382
        %v384 = vrot.slane %v383, 1
        %v385 = vmax.f32 %v383, %v384
        %v386 = vsel %vm306, %v378, -inf
        %v387 = vrot.slane %v386, 4
        %v388 = vmax.f32 %v386, %v387
        %v389 = vrot.slane %v388, 2
        %v390 = vmax.f32 %v388, %v389
        %v391 = vrot.slane %v390, 1
        %v392 = vmax.f32 %v390, %v391
        %v393 = vld [vmem:[#allocation2 + $0x2] sm:$0x1]
        %v394 = vmax.f32 %v393, %v385
        %395 = vst [vmem:[#allocation2 + $0x2] sm:$0x1] %v394
        %v396 = vld [vmem:[#allocation3 + $0x2] sm:$0x1]
        %v397 = vmax.f32 %v396, %v392
        %398 = vst [vmem:[#allocation3 + $0x2] sm:$0x1] %v397
        %s399 = sld [smem:[#allocation7 + $0x3]]
        %v400 = vstv %s399
        %v401 = vmul.f32 %v400, %v280
        %s402 = sld [smem:[#allocation7 + $0x83]]
        %v403 = vstv %s402
        %v404 = vmul.f32 %v403, %v282
        %v405 = vadd.f32 %v401, %v404
        %s406 = sld [smem:[#allocation7 + $0x103]]
        %v407 = vstv %s406
        %v408 = vmul.f32 %v407, %v284
        %v409 = vadd.f32 %v405, %v408
        %v410 = vmul.f32 %v400, %v285
        %v411 = vmul.f32 %v403, %v287
        %v412 = vadd.f32 %v410, %v411
        %v413 = vmul.f32 %v407, %v289
        %v414 = vadd.f32 %v412, %v413
        %v415 = vsel %vm306, %v409, -inf
        %v416 = vrot.slane %v415, 4
        %v417 = vmax.f32 %v415, %v416
        %v418 = vrot.slane %v417, 2
        %v419 = vmax.f32 %v417, %v418
        %v420 = vrot.slane %v419, 1
        %v421 = vmax.f32 %v419, %v420
        %v422 = vsel %vm306, %v414, -inf
        %v423 = vrot.slane %v422, 4
        %v424 = vmax.f32 %v422, %v423
        %v425 = vrot.slane %v424, 2
        %v426 = vmax.f32 %v424, %v425
        %v427 = vrot.slane %v426, 1
        %v428 = vmax.f32 %v426, %v427
        %v429 = vld [vmem:[#allocation2 + $0x3] sm:$0x1]
        %v430 = vmax.f32 %v429, %v421
        %431 = vst [vmem:[#allocation2 + $0x3] sm:$0x1] %v430
        %v432 = vld [vmem:[#allocation3 + $0x3] sm:$0x1]
        %v433 = vmax.f32 %v432, %v428
        %434 = vst [vmem:[#allocation3 + $0x3] sm:$0x1] %v433
        %s435 = sld [smem:[#allocation7 + $0x4]]
        %v436 = vstv %s435
        %v437 = vmul.f32 %v436, %v280
        %s438 = sld [smem:[#allocation7 + $0x84]]
        %v439 = vstv %s438
        %v440 = vmul.f32 %v439, %v282
        %v441 = vadd.f32 %v437, %v440
        %s442 = sld [smem:[#allocation7 + $0x104]]
        %v443 = vstv %s442
        %v444 = vmul.f32 %v443, %v284
        %v445 = vadd.f32 %v441, %v444
        %v446 = vmul.f32 %v436, %v285
        %v447 = vmul.f32 %v439, %v287
        %v448 = vadd.f32 %v446, %v447
        %v449 = vmul.f32 %v443, %v289
        %v450 = vadd.f32 %v448, %v449
        %v451 = vsel %vm306, %v445, -inf
        %v452 = vrot.slane %v451, 4
        %v453 = vmax.f32 %v451, %v452
        %v454 = vrot.slane %v453, 2
        %v455 = vmax.f32 %v453, %v454
        %v456 = vrot.slane %v455, 1
        %v457 = vmax.f32 %v455, %v456
        %v458 = vsel %vm306, %v450, -inf
        %v459 = vrot.slane %v458, 4
        %v460 = vmax.f32 %v458, %v459
        %v461 = vrot.slane %v460, 2
        %v462 = vmax.f32 %v460, %v461
        %v463 = vrot.slane %v462, 1
        %v464 = vmax.f32 %v462, %v463
        %v465 = vld [vmem:[#allocation2 + $0x4] sm:$0x1]
        %v466 = vmax.f32 %v465, %v457
        %467 = vst [vmem:[#allocation2 + $0x4] sm:$0x1] %v466
        %v468 = vld [vmem:[#allocation3 + $0x4] sm:$0x1]
        %v469 = vmax.f32 %v468, %v464
        %470 = vst [vmem:[#allocation3 + $0x4] sm:$0x1] %v469
        // Predicated region
        $region49: #{tpu_custom_call.1} parent=35 // pred_check
          %p471 = pneg %p274
        $region50: #{tpu_custom_call.1} parent=35 // pred_check_branch
          %473 = sbr.rel (%p471) target = $region52
        $region51: #{tpu_custom_call.1} parent=35 // pred_region
          %v474 = vld [vmem:[#allocation2] sm:$0x1f]
          %vm475 = vcmask 1044480
          %v476 = vsel %vm475, %v474, -inf
          %477 = vmax.xlane.f32.xlu0 %v476
          %v478 = vpop.xlane.xlu0 %477
          %v479 = vld [vmem:[#allocation3] sm:$0x1f]
          %v480 = vsel %vm475, %v479, -inf
          %481 = vmax.xlane.f32.xlu0 %v480
          %v482 = vpop.xlane.xlu0 %481
          %v483 = vld [vmem:[%s3] sm:$0x1f]
          %v484 = vadd.f32 %v478, %v483
          %v485 = vmax.f32 %v484, 0.0
          %v486 = vmin.f32 %v485, 5.0
          %v487 = vadd.f32 %v482, %v483
          %v488 = vmax.f32 %v487, 0.0
          %v489 = vmin.f32 %v488, 5.0
          %v490 = vsub.f32 %v486, %v489
          %v491 = vand.u32 2147483647, %v490
          %vm492 = vcmask 4096
          %v493 = vsel %vm492, %v491, 0.0
          %494 = vadd.xlane.f32.xlu0 %v493
          %v495 = vpop.xlane.xlu0 %494
          %v496 = vrot.slane %v495, 4
          %v497 = vadd.f32 %v495, %v496
          %v498 = vrot.slane %v497, 2
          %v499 = vadd.f32 %v497, %v498
          %v500 = vrot.slane %v499, 1
          %v501 = vadd.f32 %v499, %v500
          %s502 = vtos %v501
          %v503 = vstv %s502
          %v504 = vmul.f32 %v503, 0.04
          %vm505 = vcmask 0
          %506 = vst.msk [vmem:[%s273] sm:$0x1] %vm505, %v504
        $region52: #{tpu_custom_call.1} parent=35 // pred_fallthru
          _
        %p507 = scmp.lt.s32.totalorder %s23, 1
        %s508 = scalar_select %p507, %s23, 1
        %s509 = scalar_lea.vmem %s4, %s508
        // Predicated region
        $region53: #{tpu_custom_call.1} parent=35 // pred_check
          %p510 = pneg %p147
        $region54: #{tpu_custom_call.1} parent=35 // pred_check_branch
          %512 = sbr.rel (%p510) target = $region56
        $region55: #{tpu_custom_call.1} parent=35 // pred_region
          _
        $region56: #{tpu_custom_call.1} parent=35 // pred_fallthru
          _
      $region36: #{tpu_custom_call.1} parent=5 // pred_fallthru
        _
      %p513 = scmp.le.s32.totalorder 2, %s14
      // Predicated region
      $region57: #{tpu_custom_call.1} parent=5 // pred_check
        %p514 = pneg %p513
      $region58: #{tpu_custom_call.1} parent=5 // pred_check_branch
        %516 = sbr.rel (%p514) target = $region60
      $region59: #{tpu_custom_call.1} parent=5 // pred_region
        %s517 = ssub.s32 %s14, 2
        // Predicated region
        $region61: #{tpu_custom_call.1} parent=59 // pred_check
          %p518 = pneg %p153
        $region62: #{tpu_custom_call.1} parent=59 // pred_check_branch
          %520 = sbr.rel (%p518) target = $region64
        $region63: #{tpu_custom_call.1} parent=59 // pred_region
          %p521 = scmp.lt.s32.totalorder %s25, 1
          %s522 = scalar_select %p521, %s25, 1
          %s523 = scalar_lea.vmem %s4, %s522
        $region64: #{tpu_custom_call.1} parent=59 // pred_fallthru
          _
      $region60: #{tpu_custom_call.1} parent=5 // pred_fallthru
        _
    $region6: #{tpu_custom_call.1} parent=1 // loop_footer
      %s18 = sadd.s32 1, %s14
    $region7: #{tpu_custom_call.1} parent=1 // loop_footer_branch
      %13 = sbr.rel target = $region3
    $region8: #{tpu_custom_call.1} parent=1 // loop_exit
      _
    %524 = vsyncpa [#allocation5], 1
    %s525 = scalar_lea.sflag [#allocation5], 1
    %526 = vsyncpa %s525, 1
    %527 = vsyncpa [#allocation6], 1
    %s528 = scalar_lea.sflag [#allocation6], 1
    %529 = vsyncpa %s528, 1

</llo_original>
